<compile_context>
chip_gen: v6e
topology: v6e:2x2x1
jax: 0.10.0
libtpu: 0.0.40
codegen_flags: <defaults>
</compile_context>

<pallas_src>
import jax
import jax.numpy as jnp
from jax.experimental import pallas as pl
from jax.experimental.pallas import tpu as pltpu


def _mxu_lane_width():
    """256-wide group tiles on chips with a 256x256 MXU (v6e / v7x), else 128."""
    try:
        kind = jax.devices()[0].device_kind.lower()
    except Exception:
        return 128
    return 256 if ("v6" in kind or "v7" in kind) else 128


def _make_kernel(NGPB: int, G: int, GH: int, TD: int):
    """Kernel for a feature block of NGPB groups of G features (GH = G*H lanes each)."""

    def kernel(x_ref, w1_ref, b12_ref, w2_ref, w3_ref, b3_ref, fnn_ref):
        x = x_ref[...]                                    # (TB, TD) lane-dense
        b3 = b3_ref[0]                                    # (1, TD)
        for n in range(NGPB):                             # static trip count
            lo, hi = n * G, (n + 1) * G
            xg = x[:, lo:hi]                              # (TB, G) static lane slice
            w1 = w1_ref[0, n]                             # (G, GH)   row-block W1
            b12 = b12_ref[0, n]                           # (2, GH)   [b1; b2]
            w2 = w2_ref[0, n]                             # (GH, GH)  block-diagonal W2
            w3 = w3_ref[0, n]                             # (GH, G)   column-block W3

            # FeatureNN for the G features of this group, fused on GH lanes.
            h1 = jnp.maximum(
                jnp.dot(xg.astype(w1.dtype), w1,
                        preferred_element_type=jnp.float32) + b12[0:1, :], 0.0)
            h2 = jnp.maximum(
                jnp.dot(h1.astype(w2.dtype), w2,
                        preferred_element_type=jnp.float32) + b12[1:2, :], 0.0)
            # Write this group's (TB, G) result straight into its lane slice of the
            # output block (no concatenate, partial results not kept live).
            fnn_ref[:, lo:hi] = (
                jnp.dot(h2.astype(w3.dtype), w3,
                        preferred_element_type=jnp.float32) + b3[:, lo:hi])

        if NGPB * G < TD:
            # Deterministically zero the padding lanes (discarded by the wrapper).
            fnn_ref[:, NGPB * G:] = jnp.zeros(
                (x.shape[0], TD - NGPB * G), dtype=jnp.float32)

    return kernel


def _pack_params(params, NFB, NGPB, G, H, TD, param_dtype):
    """Pack per-feature MLP params into block-structured, lane-packed arrays."""
    w1, b1, w2, b2, w3, b3 = params
    D = w1.shape[0]
    GH = G * H
    D_w = NFB * NGPB * G          # features covered by packed weights (>= D)
    D_io = NFB * TD               # lane-dense feature width of x / fnn / b3

    padw = D_w - D
    w1 = jnp.pad(w1, ((0, padw), (0, 0), (0, 0)))          # (D_w, 1, H)
    b1 = jnp.pad(b1, ((0, padw), (0, 0)))                  # (D_w, H)
    w2 = jnp.pad(w2, ((0, padw), (0, 0), (0, 0)))          # (D_w, H, H)
    b2 = jnp.pad(b2, ((0, padw), (0, 0)))                  # (D_w, H)
    w3 = jnp.pad(w3, ((0, padw), (0, 0), (0, 0)))          # (D_w, H, 1)
    b3 = jnp.pad(b3, ((0, D_io - D), (0, 0)))              # (D_io, 1)

    eye = jnp.eye(G, dtype=jnp.float32)

    # W1p[f,n,g, k*H+h] = w1[d,0,h] * I[g,k]   (feature d = f*TD + n*G + g)
    w1_r = w1.reshape(NFB, NGPB, G, H)
    W1p = jnp.einsum('fngh,gk->fngkh', w1_r, eye).reshape(NFB, NGPB, G, GH)

    # W2p[f,n, g*H+h, l*H+k] = w2[d,h,k] * I[g,l]   (block diagonal)
    w2_r = w2.reshape(NFB, NGPB, G, H, H)
    W2p = jnp.einsum('fnghk,gl->fnghlk', w2_r, eye).reshape(NFB, NGPB, GH, GH)

    # W3p[f,n, g*H+h, l] = w3[d,h,0] * I[g,l]
    w3_r = w3.reshape(NFB, NGPB, G, H)
    W3p = jnp.einsum('fngh,gl->fnghl', w3_r, eye).reshape(NFB, NGPB, GH, G)

    # Consolidated biases (kept float32 for exact accumulation).
    b1_r = b1.reshape(NFB, NGPB, GH)
    b2_r = b2.reshape(NFB, NGPB, GH)
    B12p = jnp.stack([b1_r, b2_r], axis=2)                 # (NFB, NGPB, 2, GH)
    B3p = b3.reshape(NFB, 1, TD)                           # (NFB, 1, TD)

    W1p = W1p.astype(param_dtype)
    W2p = W2p.astype(param_dtype)
    W3p = W3p.astype(param_dtype)
    return W1p, B12p, W2p, W3p, B3p


def lanam_forward(x, params, *, param_dtype=jnp.float32):
    """x: (B, D) float32.  Returns (out (B, 1), fnn (B, D))."""
    w1, b1, w2, b2, w3, b3 = params   # (D,1,H),(D,H),(D,H,H),(D,H),(D,H,1),(D,1)
    B, D = x.shape
    H = w1.shape[-1]
    assert H <= 128 and 128 % H == 0, "hidden size must divide 128 for lane packing"

    LANES = _mxu_lane_width()          # 256 on v6e/v7x, 128 on v5e/v4
    if LANES % H != 0:
        LANES = 128
    G = LANES // H                     # features packed per lane group
    GH = G * H                         # lane width of one group (128 or 256)

    # ---- feature-axis blocking: lane-dense (multiple-of-128) x / fnn tiles ----
    TD = max(128, G)                   # output lane width per feature block
    D_grp = -(-D // G) * G             # features rounded up to whole groups
    D_io = -(-D_grp // TD) * TD        # padded feature width of x / fnn
    NFB = D_io // TD
    # If a single feature block suffices, pack & compute only groups with real
    # features; otherwise every block carries TD // G groups (last block zero-padded).
    NGPB = (TD // G) if NFB > 1 else (D_grp // G)

    # ---- batch-axis blocking: tiles up to 512 rows, minimal tail padding ----
    B8 = -(-B // 8) * 8
    NBB = -(-B8 // 512)
    TB = -(-B8 // (NBB * 8)) * 8
    B_pad = NBB * TB

    x_pad = jnp.pad(x, ((0, B_pad - B), (0, D_io - D)))     # natural (B, D) layout
    W1p, B12p, W2p, W3p, B3p = _pack_params(params, NFB, NGPB, G, H, TD, param_dtype)

    kernel = _make_kernel(NGPB, G, GH, TD)

    # Scoped-VMEM budget: double-buffered resident weight set + x/out blocks + headroom.
    wbytes = (W1p.size * W1p.dtype.itemsize + W2p.size * W2p.dtype.itemsize
              + W3p.size * W3p.dtype.itemsize + B12p.size * 4 + B3p.size * 4) // NFB
    need = 2 * (wbytes + 2 * TB * TD * 4)
    vmem_limit = int(min(max(need + (8 << 20), 32 << 20), 64 << 20))

    fnn_pad = pl.pallas_call(
        kernel,
        out_shape=jax.ShapeDtypeStruct((B_pad, D_io), jnp.float32),
        # Feature axis OUTER, batch axis INNERMOST: weight block indices are constant
        # along the inner axis, so their DMAs are skipped (weights stay VMEM-resident).
        grid=(NFB, NBB),
        in_specs=[
            pl.BlockSpec((TB, TD), lambda f, b: (b, f)),                 # x block
            pl.BlockSpec((1, NGPB, G, GH), lambda f, b: (f, 0, 0, 0)),   # W1 blocks
            pl.BlockSpec((1, NGPB, 2, GH), lambda f, b: (f, 0, 0, 0)),   # b1/b2
            pl.BlockSpec((1, NGPB, GH, GH), lambda f, b: (f, 0, 0, 0)),  # W2 block-diag
            pl.BlockSpec((1, NGPB, GH, G), lambda f, b: (f, 0, 0, 0)),   # W3 blocks
            pl.BlockSpec((1, 1, TD), lambda f, b: (f, 0, 0)),            # b3 row
        ],
        out_specs=pl.BlockSpec((TB, TD), lambda f, b: (b, f)),           # fnn, lane-dense
        compiler_params=pltpu.CompilerParams(
            dimension_semantics=("parallel", "parallel"),
            vmem_limit_bytes=vmem_limit),
    )(x_pad, W1p, B12p, W2p, W3p, B3p)

    fnn = fnn_pad[:B, :D]                                  # (B, D)
    out = jnp.sum(fnn, axis=-1, keepdims=True)             # additive model output
    return out, fnn


def lanam_ref(x, params):
    """Pure-JAX reference matching the PyTorch forward semantics."""
    w1, b1, w2, b2, w3, b3 = params
    B, D = x.shape
    cols = []
    for d in range(D):
        xd = x[:, d:d + 1]                                   # (B, 1)
        h1 = jax.nn.relu(xd @ w1[d] + b1[d])                 # (B, H)
        h2 = jax.nn.relu(h1 @ w2[d] + b2[d])                 # (B, H)
        cols.append(h2 @ w3[d] + b3[d])                      # (B, 1)
    fnn = jnp.concatenate(cols, axis=-1)                     # (B, D)
    out = jnp.sum(fnn, axis=-1, keepdims=True)               # (B, 1)
    return out, fnn


def init_params(key, in_features, hidden):
    D, H = in_features, hidden
    ks = jax.random.split(key, 6)
    scale1 = 1.0                       # fan_in = 1
    scale2 = 1.0 / jnp.sqrt(H)
    w1 = jax.random.normal(ks[0], (D, 1, H), jnp.float32) * scale1
    b1 = jax.random.normal(ks[1], (D, H), jnp.float32) * 0.1
    w2 = jax.random.normal(ks[2], (D, H, H), jnp.float32) * scale2
    b2 = jax.random.normal(ks[3], (D, H), jnp.float32) * 0.1
    w3 = jax.random.normal(ks[4], (D, H, 1), jnp.float32) * scale2
    b3 = jax.random.normal(ks[5], (D, 1), jnp.float32) * 0.1
    return (w1, b1, w2, b2, w3, b3)


if __name__ == "__main__":
    B, D, H = 8, 4, 32                  # batch, in_features, hidden size
    key = jax.random.PRNGKey(0)
    k_x, k_p = jax.random.split(key)
    x = jax.random.normal(k_x, (B, D), jnp.float32)
    params = init_params(k_p, D, H)

    out, fnn = jax.jit(lanam_forward)(x, params)
    out, fnn = jax.block_until_ready((out, fnn))

    out_exp, fnn_exp = lanam_ref(x, params)
    assert out.shape == (B, 1) and fnn.shape == (B, D)
    assert jnp.allclose(out, out_exp, rtol=1e-4, atol=1e-4)
    assert jnp.allclose(fnn, fnn_exp, rtol=1e-4, atol=1e-4)

    print("KERNEL_OK")
</pallas_src>

<mosaic_0001>
module attributes {stable_mosaic.version = 11 : i64} {
  func.func @kernel(%arg0: i32, %arg1: i32, %arg2: memref<8x128xf32, #tpu.memory_space<vmem>>, %arg3: memref<1x1x4x128xf32, #tpu.memory_space<vmem>>, %arg4: memref<1x1x2x128xf32, #tpu.memory_space<vmem>>, %arg5: memref<1x1x128x128xf32, #tpu.memory_space<vmem>>, %arg6: memref<1x1x128x4xf32, #tpu.memory_space<vmem>>, %arg7: memref<1x1x128xf32, #tpu.memory_space<vmem>>, %arg8: memref<8x128xf32, #tpu.memory_space<vmem>>) attributes {dimension_semantics = [#tpu.dimension_semantics<parallel>, #tpu.dimension_semantics<parallel>], iteration_bounds = array<i64: 1, 1>, scalar_prefetch = 0 : i64, scratch_operands = 0 : i64, tpu.core_type = #tpu.core_type<tc>, window_params = [{transform_indices = @transform_0, window_bounds = array<i64: 8, 128>}, {transform_indices = @transform_1, window_bounds = array<i64: 1, 1, 4, 128>}, {transform_indices = @transform_2, window_bounds = array<i64: 1, 1, 2, 128>}, {transform_indices = @transform_3, window_bounds = array<i64: 1, 1, 128, 128>}, {transform_indices = @transform_4, window_bounds = array<i64: 1, 1, 128, 4>}, {transform_indices = @transform_5, window_bounds = array<i64: 1, 1, 128>}, {transform_indices = @transform_6, window_bounds = array<i64: 8, 128>}]} {
    %c0 = arith.constant 0 : index
    %c0_0 = arith.constant 0 : index
    %0 = vector.load %arg2[%c0, %c0_0] : memref<8x128xf32, #tpu.memory_space<vmem>>, vector<8x128xf32>
    %c0_1 = arith.constant 0 : index
    %c0_2 = arith.constant 0 : index
    %c0_3 = arith.constant 0 : index
    %1 = vector.load %arg7[%c0_1, %c0_2, %c0_3] : memref<1x1x128xf32, #tpu.memory_space<vmem>>, vector<1x1x128xf32>
    %2 = vector.shape_cast %1 : vector<1x1x128xf32> to vector<1x128xf32>
    %3 = vector.extract_strided_slice %0 {offsets = [0, 0], sizes = [8, 4], strides = [1, 1]} : vector<8x128xf32> to vector<8x4xf32>
    %c0_4 = arith.constant 0 : index
    %c0_5 = arith.constant 0 : index
    %c0_6 = arith.constant 0 : index
    %c0_7 = arith.constant 0 : index
    %4 = vector.load %arg3[%c0_4, %c0_5, %c0_6, %c0_7] : memref<1x1x4x128xf32, #tpu.memory_space<vmem>>, vector<1x1x4x128xf32>
    %5 = vector.shape_cast %4 : vector<1x1x4x128xf32> to vector<4x128xf32>
    %c0_8 = arith.constant 0 : index
    %c0_9 = arith.constant 0 : index
    %c0_10 = arith.constant 0 : index
    %c0_11 = arith.constant 0 : index
    %6 = vector.load %arg4[%c0_8, %c0_9, %c0_10, %c0_11] : memref<1x1x2x128xf32, #tpu.memory_space<vmem>>, vector<1x1x2x128xf32>
    %7 = vector.shape_cast %6 : vector<1x1x2x128xf32> to vector<2x128xf32>
    %c0_12 = arith.constant 0 : index
    %c0_13 = arith.constant 0 : index
    %c0_14 = arith.constant 0 : index
    %c0_15 = arith.constant 0 : index
    %8 = vector.load %arg5[%c0_12, %c0_13, %c0_14, %c0_15] : memref<1x1x128x128xf32, #tpu.memory_space<vmem>>, vector<1x1x128x128xf32>
    %9 = vector.shape_cast %8 : vector<1x1x128x128xf32> to vector<128x128xf32>
    %c0_16 = arith.constant 0 : index
    %c0_17 = arith.constant 0 : index
    %c0_18 = arith.constant 0 : index
    %c0_19 = arith.constant 0 : index
    %10 = vector.load %arg6[%c0_16, %c0_17, %c0_18, %c0_19] : memref<1x1x128x4xf32, #tpu.memory_space<vmem>>, vector<1x1x128x4xf32>
    %11 = vector.shape_cast %10 : vector<1x1x128x4xf32> to vector<128x4xf32>
    %cst = arith.constant dense<0.000000e+00> : vector<8x128xf32>
    %12 = tpu.matmul %3, %5, %cst {dimension_numbers = #tpu.dot_dimension_numbers<[1], [0], [0], [1], [0, 0, 1, 1], [], []>} : vector<8x4xf32>, vector<4x128xf32>, vector<8x128xf32> -> vector<8x128xf32>
    %13 = vector.extract_strided_slice %7 {offsets = [0, 0], sizes = [1, 128], strides = [1, 1]} : vector<2x128xf32> to vector<1x128xf32>
    %14 = vector.broadcast %13 : vector<1x128xf32> to vector<8x128xf32>
    %15 = arith.addf %12, %14 : vector<8x128xf32>
    %cst_20 = arith.constant 0.000000e+00 : f32
    %16 = vector.broadcast %cst_20 : f32 to vector<8x128xf32>
    %17 = arith.maximumf %15, %16 : vector<8x128xf32>
    %cst_21 = arith.constant dense<0.000000e+00> : vector<8x128xf32>
    %18 = tpu.matmul %17, %9, %cst_21 {dimension_numbers = #tpu.dot_dimension_numbers<[1], [0], [0], [1], [0, 0, 1, 1], [], []>} : vector<8x128xf32>, vector<128x128xf32>, vector<8x128xf32> -> vector<8x128xf32>
    %19 = vector.extract_strided_slice %7 {offsets = [1, 0], sizes = [1, 128], strides = [1, 1]} : vector<2x128xf32> to vector<1x128xf32>
    %20 = vector.broadcast %19 : vector<1x128xf32> to vector<8x128xf32>
    %21 = arith.addf %18, %20 : vector<8x128xf32>
    %cst_22 = arith.constant 0.000000e+00 : f32
    %22 = vector.broadcast %cst_22 : f32 to vector<8x128xf32>
    %23 = arith.maximumf %21, %22 : vector<8x128xf32>
    %cst_23 = arith.constant dense<0.000000e+00> : vector<8x4xf32>
    %24 = tpu.matmul %23, %11, %cst_23 {dimension_numbers = #tpu.dot_dimension_numbers<[1], [0], [0], [1], [0, 0, 1, 1], [], []>} : vector<8x128xf32>, vector<128x4xf32>, vector<8x4xf32> -> vector<8x4xf32>
    %25 = vector.extract_strided_slice %2 {offsets = [0, 0], sizes = [1, 4], strides = [1, 1]} : vector<1x128xf32> to vector<1x4xf32>
    %26 = vector.broadcast %25 : vector<1x4xf32> to vector<8x4xf32>
    %27 = arith.addf %24, %26 : vector<8x4xf32>
    %c0_24 = arith.constant 0 : index
    %c0_25 = arith.constant 0 : index
    %28 = vector.load %arg8[%c0_24, %c0_25] : memref<8x128xf32, #tpu.memory_space<vmem>>, vector<8x4xf32>
    tpu.vector_store %arg8[%c0_24, %c0_25], %27 {strides = array<i32>} : memref<8x128xf32, #tpu.memory_space<vmem>>, vector<8x4xf32>,
    %cst_26 = arith.constant 0.000000e+00 : f32
    %29 = vector.broadcast %cst_26 : f32 to vector<8x124xf32>
    %c0_27 = arith.constant 0 : index
    %c4 = arith.constant 4 : index
    %30 = vector.load %arg8[%c0_27, %c4] : memref<8x128xf32, #tpu.memory_space<vmem>>, vector<8x124xf32>
    tpu.vector_store %arg8[%c0_27, %c4], %29 {strides = array<i32>} : memref<8x128xf32, #tpu.memory_space<vmem>>, vector<8x124xf32>,
    return
  }
  func.func @transform_0(%arg0: i32, %arg1: i32) -> (i32, i32) {
    %c0_i32 = arith.constant 0 : i32
    return %arg1, %arg0 : i32, i32
  }
  func.func @transform_1(%arg0: i32, %arg1: i32) -> (i32, i32, i32, i32) {
    %c0_i32 = arith.constant 0 : i32
    %c0_i32_0 = arith.constant 0 : i32
    %c0_i32_1 = arith.constant 0 : i32
    %c0_i32_2 = arith.constant 0 : i32
    return %arg0, %c0_i32, %c0_i32_0, %c0_i32_1 : i32, i32, i32, i32
  }
  func.func @transform_2(%arg0: i32, %arg1: i32) -> (i32, i32, i32, i32) {
    %c0_i32 = arith.constant 0 : i32
    %c0_i32_0 = arith.constant 0 : i32
    %c0_i32_1 = arith.constant 0 : i32
    %c0_i32_2 = arith.constant 0 : i32
    return %arg0, %c0_i32, %c0_i32_0, %c0_i32_1 : i32, i32, i32, i32
  }
  func.func @transform_3(%arg0: i32, %arg1: i32) -> (i32, i32, i32, i32) {
    %c0_i32 = arith.constant 0 : i32
    %c0_i32_0 = arith.constant 0 : i32
    %c0_i32_1 = arith.constant 0 : i32
    %c0_i32_2 = arith.constant 0 : i32
    return %arg0, %c0_i32, %c0_i32_0, %c0_i32_1 : i32, i32, i32, i32
  }
  func.func @transform_4(%arg0: i32, %arg1: i32) -> (i32, i32, i32, i32) {
    %c0_i32 = arith.constant 0 : i32
    %c0_i32_0 = arith.constant 0 : i32
    %c0_i32_1 = arith.constant 0 : i32
    %c0_i32_2 = arith.constant 0 : i32
    return %arg0, %c0_i32, %c0_i32_0, %c0_i32_1 : i32, i32, i32, i32
  }
  func.func @transform_5(%arg0: i32, %arg1: i32) -> (i32, i32, i32) {
    %c0_i32 = arith.constant 0 : i32
    %c0_i32_0 = arith.constant 0 : i32
    %c0_i32_1 = arith.constant 0 : i32
    return %arg0, %c0_i32, %c0_i32_0 : i32, i32, i32
  }
  func.func @transform_6(%arg0: i32, %arg1: i32) -> (i32, i32) {
    %c0_i32 = arith.constant 0 : i32
    return %arg1, %arg0 : i32, i32
  }
}

</mosaic_0001>

<llo_original>
// kernel: lanam_forward.1
$region0: #{lanam_forward.1}
  #allocation0 [shape = 'u32[]', space=smem, size = 0x4, offset = 0x4, fixed_abs, tag = 'smem constant byte address 0x4 - core index']
  #allocation1 [shape = 'u32[144,128]{1,0:T(1,128)}', space=vmem, size = 0x12000, scoped, tag = 'internal scratch']
  %s0 = inlined_call_operand.vmem [shape: f32[8,128], index: 0, kind: input, shape index: {}]
  %s1 = inlined_call_operand.vmem [shape: f32[1,1,4,128], index: 1, kind: input, shape index: {}]
  %s2 = inlined_call_operand.vmem [shape: f32[1,1,2,128], index: 2, kind: input, shape index: {}]
  %s3 = inlined_call_operand.vmem [shape: f32[1,1,128,128], index: 3, kind: input, shape index: {}]
  %s4 = inlined_call_operand.vmem [shape: f32[1,1,128,4], index: 4, kind: input, shape index: {}]
  %s5 = inlined_call_operand.vmem [shape: f32[1,1,128], index: 5, kind: input, shape index: {}]
  %s6 = inlined_call_operand.vmem [shape: f32[8,128], index: 6, kind: output, shape index: {}]
  %s7 = sld [smem:[#allocation0]]
  $region34: #{lanam_forward.1} parent=0
    _
  %s9 = ssub.s32 1, %s7
  %s10 = scalar_select 0, %s9, %s7
  // Predicated region
  $region2: #{lanam_forward.1} parent=0 // pred_check
    _
  $region3: #{lanam_forward.1} parent=0 // pred_check_branch
    %12 = sbr.rel (0) target = $region5
  $region4: #{lanam_forward.1} parent=0 // pred_region
    _
  $region5: #{lanam_forward.1} parent=0 // pred_fallthru
    _
  // Predicated region
  $region6: #{lanam_forward.1} parent=0 // pred_check
    _
  $region7: #{lanam_forward.1} parent=0 // pred_check_branch
    %14 = sbr.rel (0) target = $region9
  $region8: #{lanam_forward.1} parent=0 // pred_region
    _
  $region9: #{lanam_forward.1} parent=0 // pred_fallthru
    _
  // Predicated region
  $region10: #{lanam_forward.1} parent=0 // pred_check
    _
  $region11: #{lanam_forward.1} parent=0 // pred_check_branch
    %16 = sbr.rel (0) target = $region13
  $region12: #{lanam_forward.1} parent=0 // pred_region
    _
  $region13: #{lanam_forward.1} parent=0 // pred_fallthru
    _
  // Predicated region
  $region14: #{lanam_forward.1} parent=0 // pred_check
    _
  $region15: #{lanam_forward.1} parent=0 // pred_check_branch
    %18 = sbr.rel (0) target = $region17
  $region16: #{lanam_forward.1} parent=0 // pred_region
    _
  $region17: #{lanam_forward.1} parent=0 // pred_fallthru
    _
  // Predicated region
  $region18: #{lanam_forward.1} parent=0 // pred_check
    _
  $region19: #{lanam_forward.1} parent=0 // pred_check_branch
    %20 = sbr.rel (0) target = $region21
  $region20: #{lanam_forward.1} parent=0 // pred_region
    _
  $region21: #{lanam_forward.1} parent=0 // pred_fallthru
    _
  // Predicated region
  $region22: #{lanam_forward.1} parent=0 // pred_check
    _
  $region23: #{lanam_forward.1} parent=0 // pred_check_branch
    %22 = sbr.rel (0) target = $region25
  $region24: #{lanam_forward.1} parent=0 // pred_region
    _
  $region25: #{lanam_forward.1} parent=0 // pred_fallthru
    _
  %v23 = vld [vmem:[%s0] sm:$0xff]
  %v24 = vld [vmem:[%s5] sm:$0x1]
  %v25 = vld [vmem:[%s1] sm:$0xf]
  %v26 = vld [vmem:[%s2] sm:$0x3]
  %v27 = vld [vmem:[%s3] sm:$0xff]
  %v28 = vld [vmem:[%s3 + $0x8] sm:$0xff]
  %v29 = vld [vmem:[%s3 + $0x10] sm:$0xff]
  %v30 = vld [vmem:[%s3 + $0x18] sm:$0xff]
  %v31 = vld [vmem:[%s3 + $0x20] sm:$0xff]
  %v32 = vld [vmem:[%s3 + $0x28] sm:$0xff]
  %v33 = vld [vmem:[%s3 + $0x30] sm:$0xff]
  %v34 = vld [vmem:[%s3 + $0x38] sm:$0xff]
  %v35 = vld [vmem:[%s3 + $0x40] sm:$0xff]
  %v36 = vld [vmem:[%s3 + $0x48] sm:$0xff]
  %v37 = vld [vmem:[%s3 + $0x50] sm:$0xff]
  %v38 = vld [vmem:[%s3 + $0x58] sm:$0xff]
  %v39 = vld [vmem:[%s3 + $0x60] sm:$0xff]
  %v40 = vld [vmem:[%s3 + $0x68] sm:$0xff]
  %v41 = vld [vmem:[%s3 + $0x70] sm:$0xff]
  %v42 = vld [vmem:[%s3 + $0x78] sm:$0xff]
  %v43 = vld [vmem:[%s4] sm:$0xff]
  %v44 = vld [vmem:[%s4 + $0x8] sm:$0xff]
  %v45 = vld [vmem:[%s4 + $0x10] sm:$0xff]
  %v46 = vld [vmem:[%s4 + $0x18] sm:$0xff]
  %v47 = vld [vmem:[%s4 + $0x20] sm:$0xff]
  %v48 = vld [vmem:[%s4 + $0x28] sm:$0xff]
  %v49 = vld [vmem:[%s4 + $0x30] sm:$0xff]
  %v50 = vld [vmem:[%s4 + $0x38] sm:$0xff]
  %v51 = vld [vmem:[%s4 + $0x40] sm:$0xff]
  %v52 = vld [vmem:[%s4 + $0x48] sm:$0xff]
  %v53 = vld [vmem:[%s4 + $0x50] sm:$0xff]
  %v54 = vld [vmem:[%s4 + $0x58] sm:$0xff]
  %v55 = vld [vmem:[%s4 + $0x60] sm:$0xff]
  %v56 = vld [vmem:[%s4 + $0x68] sm:$0xff]
  %v57 = vld [vmem:[%s4 + $0x70] sm:$0xff]
  %v58 = vld [vmem:[%s4 + $0x78] sm:$0xff]
  %v59 = vlaneseq
  %v60 = vshrl.u32 %v59, 7
  %v61 = vsub.s32 0, %v60
  %v62 = vrot.slane %v26, %v61
  %vm63 = vcmask 31744
  %v65 = vsel %vm63, %v23, 0
  %vm67 = vcmask 1043456
  %v69 = vsel %vm67, %v25, 0
  %71 = vmatprep.subr.mxu0 0.0
  %72 = vmatpush1.msra.mxu0 0.0
  %73 = vmatprep.subr.mxu0 0.0
  %74 = vmatpush1.msra.mxu0 0.0
  %75 = vmatprep.subr.mxu0 0.0
  %76 = vmatpush1.msra.mxu0 0.0
  %77 = vmatprep.subr.mxu0 0.0
  %78 = vmatpush1.msra.mxu0 0.0
  %79 = vmatprep.subr.mxu0 0.0
  %80 = vmatpush1.msra.mxu0 0.0
  %81 = vmatprep.subr.mxu0 0.0
  %82 = vmatpush1.msra.mxu0 0.0
  %83 = vmatprep.subr.mxu0 0.0
  %84 = vmatpush1.msra.mxu0 0.0
  %85 = vmatprep.subr.mxu0 0.0
  %86 = vmatpush1.msra.mxu0 0.0
  %87 = vmatprep.subr.mxu0 0.0
  %88 = vmatpush1.msra.mxu0 0.0
  %89 = vmatprep.subr.mxu0 0.0
  %90 = vmatpush1.msra.mxu0 0.0
  %91 = vmatprep.subr.mxu0 0.0
  %92 = vmatpush1.msra.mxu0 0.0
  %93 = vmatprep.subr.mxu0 0.0
  %94 = vmatpush1.msra.mxu0 0.0
  %95 = vmatprep.subr.mxu0 0.0
  %96 = vmatpush1.msra.mxu0 0.0
  %97 = vmatprep.subr.mxu0 0.0
  %98 = vmatpush1.msra.mxu0 0.0
  %99 = vmatprep.subr.mxu0 0.0
  %100 = vmatpush1.msra.mxu0 0.0
  %101 = vmatprep.subr.mxu0 0.0
  %102 = vmatpush1.msra.mxu0 %v69
  %103 = vmatprep.subr.mxu0 0.0
  %104 = vmatpush2.msra.mxu0 0.0
  %105 = vmatprep.subr.mxu0 0.0
  %106 = vmatpush2.msra.mxu0 0.0
  %107 = vmatprep.subr.mxu0 0.0
  %108 = vmatpush2.msra.mxu0 0.0
  %109 = vmatprep.subr.mxu0 0.0
  %110 = vmatpush2.msra.mxu0 0.0
  %111 = vmatprep.subr.mxu0 0.0
  %112 = vmatpush2.msra.mxu0 0.0
  %113 = vmatprep.subr.mxu0 0.0
  %114 = vmatpush2.msra.mxu0 0.0
  %115 = vmatprep.subr.mxu0 0.0
  %116 = vmatpush2.msra.mxu0 0.0
  %117 = vmatprep.subr.mxu0 0.0
  %118 = vmatpush2.msra.mxu0 0.0
  %119 = vmatprep.subr.mxu0 0.0
  %120 = vmatpush2.msra.mxu0 0.0
  %121 = vmatprep.subr.mxu0 0.0
  %122 = vmatpush2.msra.mxu0 0.0
  %123 = vmatprep.subr.mxu0 0.0
  %124 = vmatpush2.msra.mxu0 0.0
  %125 = vmatprep.subr.mxu0 0.0
  %126 = vmatpush2.msra.mxu0 0.0
  %127 = vmatprep.subr.mxu0 0.0
  %128 = vmatpush2.msra.mxu0 0.0
  %129 = vmatprep.subr.mxu0 0.0
  %130 = vmatpush2.msra.mxu0 0.0
  %131 = vmatprep.subr.mxu0 0.0
  %132 = vmatpush2.msra.mxu0 0.0
  %133 = vmatprep.subr.mxu0 0.0
  %134 = vmatpush2.msra.mxu0 0.0
  %135 = vmatprep.mubr.f32.mxu0 0.0
  %136 = vmatmul.mubr.f32.gmra.mxu0 %v65
  %v137 = vpop.f32.mrf.mxu0
  %v138 = vadd.f32 %v62, %v137
  %v139 = vpop.f32.mrf.mxu0
  %140 = vdwg.mxu0
  %v141 = vmax.f32 %v138, 0.0
  %v142 = vlaneseq
  %v143 = vshrl.u32 %v142, 7
  %v144 = vsub.s32 1, %v143
  %v145 = vrot.slane %v26, %v144
  %146 = vmatprep.subr.mxu0 0.0
  %147 = vmatpush1.msra.mxu0 %v42
  %148 = vmatprep.subr.mxu0 0.0
  %149 = vmatpush1.msra.mxu0 %v41
  %150 = vmatprep.subr.mxu0 0.0
  %151 = vmatpush1.msra.mxu0 %v40
  %152 = vmatprep.subr.mxu0 0.0
  %153 = vmatpush1.msra.mxu0 %v39
  %154 = vmatprep.subr.mxu0 0.0
  %155 = vmatpush1.msra.mxu0 %v38
  %156 = vmatprep.subr.mxu0 0.0
  %157 = vmatpush1.msra.mxu0 %v37
  %158 = vmatprep.subr.mxu0 0.0
  %159 = vmatpush1.msra.mxu0 %v36
  %160 = vmatprep.subr.mxu0 0.0
  %161 = vmatpush1.msra.mxu0 %v35
  %162 = vmatprep.subr.mxu0 0.0
  %163 = vmatpush1.msra.mxu0 %v34
  %164 = vmatprep.subr.mxu0 0.0
  %165 = vmatpush1.msra.mxu0 %v33
  %166 = vmatprep.subr.mxu0 0.0
  %167 = vmatpush1.msra.mxu0 %v32
  %168 = vmatprep.subr.mxu0 0.0
  %169 = vmatpush1.msra.mxu0 %v31
  %170 = vmatprep.subr.mxu0 0.0
  %171 = vmatpush1.msra.mxu0 %v30
  %172 = vmatprep.subr.mxu0 0.0
  %173 = vmatpush1.msra.mxu0 %v29
  %174 = vmatprep.subr.mxu0 0.0
  %175 = vmatpush1.msra.mxu0 %v28
  %176 = vmatprep.subr.mxu0 0.0
  %177 = vmatpush1.msra.mxu0 %v27
  %178 = vmatprep.subr.mxu0 0.0
  %179 = vmatpush2.msra.mxu0 0.0
  %180 = vmatprep.subr.mxu0 0.0
  %181 = vmatpush2.msra.mxu0 0.0
  %182 = vmatprep.subr.mxu0 0.0
  %183 = vmatpush2.msra.mxu0 0.0
  %184 = vmatprep.subr.mxu0 0.0
  %185 = vmatpush2.msra.mxu0 0.0
  %186 = vmatprep.subr.mxu0 0.0
  %187 = vmatpush2.msra.mxu0 0.0
  %188 = vmatprep.subr.mxu0 0.0
  %189 = vmatpush2.msra.mxu0 0.0
  %190 = vmatprep.subr.mxu0 0.0
  %191 = vmatpush2.msra.mxu0 0.0
  %192 = vmatprep.subr.mxu0 0.0
  %193 = vmatpush2.msra.mxu0 0.0
  %194 = vmatprep.subr.mxu0 0.0
  %195 = vmatpush2.msra.mxu0 0.0
  %196 = vmatprep.subr.mxu0 0.0
  %197 = vmatpush2.msra.mxu0 0.0
  %198 = vmatprep.subr.mxu0 0.0
  %199 = vmatpush2.msra.mxu0 0.0
  %200 = vmatprep.subr.mxu0 0.0
  %201 = vmatpush2.msra.mxu0 0.0
  %202 = vmatprep.subr.mxu0 0.0
  %203 = vmatpush2.msra.mxu0 0.0
  %204 = vmatprep.subr.mxu0 0.0
  %205 = vmatpush2.msra.mxu0 0.0
  %206 = vmatprep.subr.mxu0 0.0
  %207 = vmatpush2.msra.mxu0 0.0
  %208 = vmatprep.subr.mxu0 0.0
  %209 = vmatpush2.msra.mxu0 0.0
  %210 = vmatprep.mubr.f32.mxu0 0.0
  %211 = vmatmul.mubr.f32.gmra.mxu0 %v141
  %v212 = vpop.f32.mrf.mxu0
  %v213 = vadd.f32 %v145, %v212
  %v214 = vpop.f32.mrf.mxu0
  %215 = vdwg.mxu0
  %v216 = vmax.f32 %v213, 0.0
  %v218 = vlaneseq
  %v219 = vshrl.u32 %v218, 7
  %v220 = vsub.s32 0, %v219
  %v221 = vrot.slane %v24, %v220
  %223 = vmatprep.subr.mxu0 0.0
  %224 = vmatpush1.msra.mxu0 %v58
  %225 = vmatprep.subr.mxu0 0.0
  %226 = vmatpush1.msra.mxu0 %v57
  %227 = vmatprep.subr.mxu0 0.0
  %228 = vmatpush1.msra.mxu0 %v56
  %229 = vmatprep.subr.mxu0 0.0
  %230 = vmatpush1.msra.mxu0 %v55
  %231 = vmatprep.subr.mxu0 0.0
  %232 = vmatpush1.msra.mxu0 %v54
  %233 = vmatprep.subr.mxu0 0.0
  %234 = vmatpush1.msra.mxu0 %v53
  %235 = vmatprep.subr.mxu0 0.0
  %236 = vmatpush1.msra.mxu0 %v52
  %237 = vmatprep.subr.mxu0 0.0
  %238 = vmatpush1.msra.mxu0 %v51
  %239 = vmatprep.subr.mxu0 0.0
  %240 = vmatpush1.msra.mxu0 %v50
  %241 = vmatprep.subr.mxu0 0.0
  %242 = vmatpush1.msra.mxu0 %v49
  %243 = vmatprep.subr.mxu0 0.0
  %244 = vmatpush1.msra.mxu0 %v48
  %245 = vmatprep.subr.mxu0 0.0
  %246 = vmatpush1.msra.mxu0 %v47
  %247 = vmatprep.subr.mxu0 0.0
  %248 = vmatpush1.msra.mxu0 %v46
  %249 = vmatprep.subr.mxu0 0.0
  %250 = vmatpush1.msra.mxu0 %v45
  %251 = vmatprep.subr.mxu0 0.0
  %252 = vmatpush1.msra.mxu0 %v44
  %253 = vmatprep.subr.mxu0 0.0
  %254 = vmatpush1.msra.mxu0 %v43
  %255 = vmatprep.subr.mxu0 0.0
  %256 = vmatpush2.msra.mxu0 0.0
  %257 = vmatprep.subr.mxu0 0.0
  %258 = vmatpush2.msra.mxu0 0.0
  %259 = vmatprep.subr.mxu0 0.0
  %260 = vmatpush2.msra.mxu0 0.0
  %261 = vmatprep.subr.mxu0 0.0
  %262 = vmatpush2.msra.mxu0 0.0
  %263 = vmatprep.subr.mxu0 0.0
  %264 = vmatpush2.msra.mxu0 0.0
  %265 = vmatprep.subr.mxu0 0.0
  %266 = vmatpush2.msra.mxu0 0.0
  %267 = vmatprep.subr.mxu0 0.0
  %268 = vmatpush2.msra.mxu0 0.0
  %269 = vmatprep.subr.mxu0 0.0
  %270 = vmatpush2.msra.mxu0 0.0
  %271 = vmatprep.subr.mxu0 0.0
  %272 = vmatpush2.msra.mxu0 0.0
  %273 = vmatprep.subr.mxu0 0.0
  %274 = vmatpush2.msra.mxu0 0.0
  %275 = vmatprep.subr.mxu0 0.0
  %276 = vmatpush2.msra.mxu0 0.0
  %277 = vmatprep.subr.mxu0 0.0
  %278 = vmatpush2.msra.mxu0 0.0
  %279 = vmatprep.subr.mxu0 0.0
  %280 = vmatpush2.msra.mxu0 0.0
  %281 = vmatprep.subr.mxu0 0.0
  %282 = vmatpush2.msra.mxu0 0.0
  %283 = vmatprep.subr.mxu0 0.0
  %284 = vmatpush2.msra.mxu0 0.0
  %285 = vmatprep.subr.mxu0 0.0
  %286 = vmatpush2.msra.mxu0 0.0
  %287 = vmatprep.mubr.f32.mxu0 0.0
  %288 = vmatmul.mubr.f32.gmra.mxu0 %v216
  %v289 = vpop.f32.mrf.mxu0
  %v290 = vadd.f32 %v221, %v289
  %v291 = vpop.f32.mrf.mxu0
  %292 = vdwg.mxu0
  %293 = vst.msk [vmem:[%s6] sm:$0xff] %vm63, %v290
  %vm294 = vcmask 1047584
  %295 = vst.msk [vmem:[%s6] sm:$0xff] %vm294, 0.0
  // Predicated region
  $region26: #{lanam_forward.1} parent=0 // pred_check
    _
  $region27: #{lanam_forward.1} parent=0 // pred_check_branch
    %297 = sbr.rel (0) target = $region29
  $region28: #{lanam_forward.1} parent=0 // pred_region
    _
  $region29: #{lanam_forward.1} parent=0 // pred_fallthru
    _
  // Predicated region
  $region30: #{lanam_forward.1} parent=0 // pred_check
    _
  $region31: #{lanam_forward.1} parent=0 // pred_check_branch
    %299 = sbr.rel (0) target = $region33
  $region32: #{lanam_forward.1} parent=0 // pred_region
    _
  $region33: #{lanam_forward.1} parent=0 // pred_fallthru
    _

</llo_original>
